<compile_context>
chip_gen: v7x
topology: tpu7x:2x2x1
jax: 0.10.0
libtpu: 0.0.40
codegen_flags: <defaults>
</compile_context>

<pallas_src>
import functools

import numpy as np

import jax
import jax.numpy as jnp
from jax.experimental import pallas as pl
from jax.experimental.pallas import tpu as pltpu

NEG_SLOPE = 0.1          # nn.LeakyReLU(0.1) in FaceEncoder2
KSIZE = 4                # Conv2d kernel_size=4, stride=2, padding=1
STRIDE = 2
PAD = 1

CFG = dict(filters=4, img_size=16, emb_size=512, downsamples=2)


# ----------------------------------------------------------------------------
# Fused whole-network kernel
# ----------------------------------------------------------------------------

def _face_encoder2_kernel(p0_ref, w0_ref, b0_ref, s1_ref, w1_ref, b1_ref,
                          wd_ref, bd_ref, o_ref, p1s_ref, feat_ref):
    """conv0 -> LeakyReLU -> conv1 -> LeakyReLU -> flatten -> Linear, all in VMEM.

    p0_ref : [C0in*K*K, B*H0*W0]   stage-0 im2col patches (bf16), rows (c,kh,kw), cols (b,oh,ow)
    w0_ref : [C0, C0in*K*K]        conv0 weight (bf16)
    s1_ref : [B*H0*W0, K*K*B*H1*W1] 0/1 selection matrix building conv1's patch matrix (bf16)
    w1_ref : [C1, K*K*C0]          conv1 weight, columns ordered (kh,kw,cin) (bf16)
    wd_ref : [C1*H1*W1, emb]       dense weight, rows in NCHW flatten order (bf16)
    p1s_ref: [K*K*C0, B*H1*W1]     scratch: conv1 patch matrix (f32)
    feat_ref:[B, C1*H1*W1]         scratch: flattened features (f32)
    """
    kk = KSIZE * KSIZE
    c0 = w0_ref.shape[0]
    c1 = w1_ref.shape[0]
    batch = feat_ref.shape[0]
    n1 = p1s_ref.shape[1]          # B*H1*W1
    hw1 = n1 // batch

    # --- stage 0: conv0 as matmul + bias + LeakyReLU (lane-dense output) ---------------
    y0 = jnp.dot(w0_ref[...], p0_ref[...], preferred_element_type=jnp.float32)
    y0 = y0 + b0_ref[...]
    a0 = jnp.where(y0 > 0, y0, NEG_SLOPE * y0).astype(jnp.bfloat16)    # [c0, B*H0*W0]

    # --- stage 1 patch formation, fully in-VMEM:
    #     one selection matmul (zero columns of S1 implement the conv padding) and
    #     K*K static block copies that move the (kh,kw) offset from lanes to sublanes. ---
    sel = jnp.dot(a0, s1_ref[...], preferred_element_type=jnp.float32)  # [c0, kk*n1]
    for off in range(kk):
        p1s_ref[off * c0:(off + 1) * c0, :] = sel[:, off * n1:(off + 1) * n1]

    # --- stage 1: conv1 as ONE matmul over the full (kh,kw,cin) contraction ------------
    y1 = jnp.dot(w1_ref[...], p1s_ref[...].astype(jnp.bfloat16),
                 preferred_element_type=jnp.float32)
    y1 = y1 + b1_ref[...]
    a1 = jnp.where(y1 > 0, y1, NEG_SLOPE * y1)                          # [c1, B*hw1] f32

    # --- flatten to PyTorch NCHW order: feat[b, c*hw1 + s] = a1[c, b*hw1 + s] ----------
    for b in range(batch):
        for c in range(c1):
            feat_ref[b:b + 1, c * hw1:(c + 1) * hw1] = a1[c:c + 1, b * hw1:(b + 1) * hw1]

    # --- dense: ONE [B, feat] @ [feat, emb] matmul, batched over B ---------------------
    emb = jnp.dot(feat_ref[...].astype(jnp.bfloat16), wd_ref[...],
                  preferred_element_type=jnp.float32)
    o_ref[...] = emb + bd_ref[...]


# ----------------------------------------------------------------------------
# Wrapper-side layout glue (runs once, on the raw input / weights only)
# ----------------------------------------------------------------------------

def _im2col_T(x, K, stride, padding):
    """-> [C*K*K, B*Ho*Wo]; rows ordered (c,kh,kw), cols ordered (b,oh,ow)."""
    B, C, H, W = x.shape
    xp = jnp.pad(x, ((0, 0), (0, 0), (padding, padding), (padding, padding)))
    Ho = (H + 2 * padding - K) // stride + 1
    Wo = (W + 2 * padding - K) // stride + 1
    cols = [xp[:, :, kh:kh + stride * Ho:stride, kw:kw + stride * Wo:stride]
            for kh in range(K) for kw in range(K)]
    p = jnp.stack(cols, axis=2)                           # [B, C, K*K, Ho, Wo]
    p = p.transpose(1, 2, 0, 3, 4).reshape(C * K * K, B * Ho * Wo)
    return p, Ho, Wo


@functools.lru_cache(maxsize=None)
def _conv_selection_matrix(batch, h_in, w_in, K, stride, padding):
    """0/1 matrix S s.t. (act[C, B*h_in*w_in] @ S)[:, off*Nout + j] is the conv patch
    element for offset off=(kh,kw) and output position j=(b,oh,ow); padded positions are
    zero columns."""
    h_out = (h_in + 2 * padding - K) // stride + 1
    w_out = (w_in + 2 * padding - K) // stride + 1
    n_in = batch * h_in * w_in
    n_out = batch * h_out * w_out
    S = np.zeros((n_in, K * K * n_out), np.float32)
    for kh in range(K):
        for kw in range(K):
            off = kh * K + kw
            for b in range(batch):
                for oh in range(h_out):
                    ih = stride * oh + kh - padding
                    if not 0 <= ih < h_in:
                        continue
                    for ow in range(w_out):
                        iw = stride * ow + kw - padding
                        if not 0 <= iw < w_in:
                            continue
                        src = (b * h_in + ih) * w_in + iw
                        dst = off * n_out + (b * h_out + oh) * w_out + ow
                        S[src, dst] = 1.0
    return S


# ----------------------------------------------------------------------------
# Parameters + forward (mirrors FaceEncoder2.forward)
# ----------------------------------------------------------------------------

def init_params(key, cfg):
    keys = iter(jax.random.split(key, 32))

    def rnd(shape, scale=0.05):
        return scale * jax.random.normal(next(keys), shape, jnp.float32)

    F = cfg["filters"]
    D = cfg["downsamples"]
    p = {}
    for i in range(D):
        inp = 3 if i == 0 else F * 2 ** (i - 1)
        out = F * 2 ** i
        p[f"conv{i}_w"] = rnd((out, inp, KSIZE, KSIZE))   # PyTorch Conv2d OIHW layout
        p[f"conv{i}_b"] = rnd((out,))
    feat = int(F * 2 ** (D - 1) * (cfg["img_size"] / 2 ** D) ** 2)
    p["dense_w"] = rnd((feat, cfg["emb_size"]))           # rows = NCHW flatten order
    p["dense_b"] = rnd((cfg["emb_size"],))
    return p


@jax.jit
def encoder_forward(p, x):
    cfg = CFG
    F = cfg["filters"]
    D = cfg["downsamples"]
    assert D == 2  # TODO(synk): generalize the fused kernel to other `downsamples`
    B = x.shape[0]
    emb = cfg["emb_size"]
    c0, c1 = F, F * 2

    # Stage-0 im2col on the raw image only; cast to bf16 BEFORE the 4x duplication.
    p0, h0, w0_sp = _im2col_T(x.astype(jnp.bfloat16), KSIZE, STRIDE, PAD)

    h1 = (h0 + 2 * PAD - KSIZE) // STRIDE + 1
    w1_sp = (w0_sp + 2 * PAD - KSIZE) // STRIDE + 1
    n1 = B * h1 * w1_sp
    feat = c1 * h1 * w1_sp

    w0m = p["conv0_w"].reshape(c0, -1).astype(jnp.bfloat16)               # (c,kh,kw) cols
    b0 = p["conv0_b"].reshape(c0, 1).astype(jnp.float32)
    # conv1 weight columns ordered (kh,kw,cin) to match in-kernel patch rows (off,cin).
    w1m = p["conv1_w"].transpose(0, 2, 3, 1).reshape(c1, -1).astype(jnp.bfloat16)
    b1 = p["conv1_b"].reshape(c1, 1).astype(jnp.float32)
    wd = p["dense_w"].astype(jnp.bfloat16)                                 # [feat, emb]
    bd = p["dense_b"].reshape(1, emb).astype(jnp.float32)

    s1 = jnp.asarray(_conv_selection_matrix(B, h0, w0_sp, KSIZE, STRIDE, PAD),
                     jnp.bfloat16)

    # TODO(synk): for large B / realistic frames, split a "parallel" grid over batch or
    #             spatial tiles so v7x's second TensorCore participates.
    return pl.pallas_call(
        _face_encoder2_kernel,
        out_shape=jax.ShapeDtypeStruct((B, emb), jnp.float32),
        grid=(1,),
        in_specs=[
            pl.BlockSpec(p0.shape, lambda i: (0, 0)),
            pl.BlockSpec(w0m.shape, lambda i: (0, 0)),
            pl.BlockSpec(b0.shape, lambda i: (0, 0)),
            pl.BlockSpec(s1.shape, lambda i: (0, 0)),
            pl.BlockSpec(w1m.shape, lambda i: (0, 0)),
            pl.BlockSpec(b1.shape, lambda i: (0, 0)),
            pl.BlockSpec(wd.shape, lambda i: (0, 0)),
            pl.BlockSpec(bd.shape, lambda i: (0, 0)),
        ],
        out_specs=pl.BlockSpec((B, emb), lambda i: (0, 0)),
        scratch_shapes=[
            pltpu.VMEM((c0 * KSIZE * KSIZE, n1), jnp.float32),   # conv1 patch matrix
            pltpu.VMEM((B, feat), jnp.float32),                  # flattened features
        ],
        compiler_params=pltpu.CompilerParams(
            dimension_semantics=("arbitrary",)),
    )(p0, w0m, b0, s1, w1m, b1, wd, bd)


# ----------------------------------------------------------------------------
# Pure-JAX reference (f32) for a loose numerical check
# ----------------------------------------------------------------------------

def reference_forward(p, x):
    def stage(h, w, b):
        y = jax.lax.conv_general_dilated(
            h, w, window_strides=(STRIDE, STRIDE), padding=((PAD, PAD), (PAD, PAD)),
            dimension_numbers=("NCHW", "OIHW", "NCHW"))
        y = y + b.reshape(1, -1, 1, 1)
        return jnp.where(y > 0, y, NEG_SLOPE * y)

    h = stage(x, p["conv0_w"], p["conv0_b"])
    h = stage(h, p["conv1_w"], p["conv1_b"])
    h = h.reshape(h.shape[0], -1)
    return h @ p["dense_w"] + p["dense_b"]


# ----------------------------------------------------------------------------

if __name__ == "__main__":
    key = jax.random.PRNGKey(0)
    k_param, k_img = jax.random.split(key)

    params = init_params(k_param, CFG)
    B = 2
    img = jax.random.normal(k_img, (B, 3, CFG["img_size"], CFG["img_size"]),
                            jnp.float32)

    out = jax.block_until_ready(encoder_forward(params, img))

    assert out.shape == (B, CFG["emb_size"]), out.shape
    assert bool(jnp.all(jnp.isfinite(out)))

    # Loose check vs. f32 reference (kernel math is bf16 on the MXU, f32 accumulation).
    ref = reference_forward(params, img)
    err = float(jnp.max(jnp.abs(out - ref)))
    scale = float(jnp.max(jnp.abs(ref))) + 1e-6
    assert err <= 5e-2 * scale + 5e-3, (err, scale)

    print("KERNEL_OK")
</pallas_src>

<mosaic_0001>
module attributes {stable_mosaic.version = 11 : i64} {
  func.func @_face_encoder2_kernel(%arg0: i32, %arg1: memref<48x128xbf16, #tpu.memory_space<vmem>>, %arg2: memref<4x48xbf16, #tpu.memory_space<vmem>>, %arg3: memref<4x1xf32, #tpu.memory_space<vmem>>, %arg4: memref<128x512xbf16, #tpu.memory_space<vmem>>, %arg5: memref<8x64xbf16, #tpu.memory_space<vmem>>, %arg6: memref<8x1xf32, #tpu.memory_space<vmem>>, %arg7: memref<128x512xbf16, #tpu.memory_space<vmem>>, %arg8: memref<1x512xf32, #tpu.memory_space<vmem>>, %arg9: memref<2x512xf32, #tpu.memory_space<vmem>>, %arg10: memref<64x32xf32, #tpu.memory_space<vmem>>, %arg11: memref<2x128xf32, #tpu.memory_space<vmem>>) attributes {dimension_semantics = [#tpu.dimension_semantics<arbitrary>], iteration_bounds = array<i64: 1>, scalar_prefetch = 0 : i64, scratch_operands = 2 : i64, tpu.core_type = #tpu.core_type<tc>, window_params = [{pipeline_mode = #tpu.pipeline_mode<synchronous>, transform_indices = @transform_0, window_bounds = array<i64: 48, 128>}, {pipeline_mode = #tpu.pipeline_mode<synchronous>, transform_indices = @transform_1, window_bounds = array<i64: 4, 48>}, {pipeline_mode = #tpu.pipeline_mode<synchronous>, transform_indices = @transform_2, window_bounds = array<i64: 4, 1>}, {pipeline_mode = #tpu.pipeline_mode<synchronous>, transform_indices = @transform_3, window_bounds = array<i64: 128, 512>}, {pipeline_mode = #tpu.pipeline_mode<synchronous>, transform_indices = @transform_4, window_bounds = array<i64: 8, 64>}, {pipeline_mode = #tpu.pipeline_mode<synchronous>, transform_indices = @transform_5, window_bounds = array<i64: 8, 1>}, {pipeline_mode = #tpu.pipeline_mode<synchronous>, transform_indices = @transform_6, window_bounds = array<i64: 128, 512>}, {pipeline_mode = #tpu.pipeline_mode<synchronous>, transform_indices = @transform_7, window_bounds = array<i64: 1, 512>}, {pipeline_mode = #tpu.pipeline_mode<synchronous>, transform_indices = @transform_8, window_bounds = array<i64: 2, 512>}]} {
    %c0 = arith.constant 0 : index
    %c0_0 = arith.constant 0 : index
    %0 = vector.load %arg2[%c0, %c0_0] : memref<4x48xbf16, #tpu.memory_space<vmem>>, vector<4x48xbf16>
    %c0_1 = arith.constant 0 : index
    %c0_2 = arith.constant 0 : index
    %1 = vector.load %arg1[%c0_1, %c0_2] : memref<48x128xbf16, #tpu.memory_space<vmem>>, vector<48x128xbf16>
    %cst = arith.constant dense<0.000000e+00> : vector<4x128xf32>
    %2 = tpu.matmul %0, %1, %cst {dimension_numbers = #tpu.dot_dimension_numbers<[1], [0], [0], [1], [0, 0, 1, 1], [], []>} : vector<4x48xbf16>, vector<48x128xbf16>, vector<4x128xf32> -> vector<4x128xf32>
    %c0_3 = arith.constant 0 : index
    %c0_4 = arith.constant 0 : index
    %3 = vector.load %arg3[%c0_3, %c0_4] : memref<4x1xf32, #tpu.memory_space<vmem>>, vector<4x1xf32>
    %4 = vector.broadcast %3 : vector<4x1xf32> to vector<4x128xf32>
    %5 = arith.addf %2, %4 : vector<4x128xf32>
    %cst_5 = arith.constant 0.000000e+00 : f32
    %6 = vector.broadcast %cst_5 : f32 to vector<4x128xf32>
    %7 = arith.cmpf ogt, %5, %6 : vector<4x128xf32>
    %cst_6 = arith.constant 1.000000e-01 : f32
    %8 = vector.broadcast %cst_6 : f32 to vector<4x128xf32>
    %9 = arith.mulf %8, %5 : vector<4x128xf32>
    %10 = arith.select %7, %5, %9 : vector<4x128xi1>, vector<4x128xf32>
    %11 = arith.truncf %10 : vector<4x128xf32> to vector<4x128xbf16>
    %c0_7 = arith.constant 0 : index
    %c0_8 = arith.constant 0 : index
    %12 = vector.load %arg4[%c0_7, %c0_8] : memref<128x512xbf16, #tpu.memory_space<vmem>>, vector<128x512xbf16>
    %cst_9 = arith.constant dense<0.000000e+00> : vector<4x512xf32>
    %13 = tpu.matmul %11, %12, %cst_9 {dimension_numbers = #tpu.dot_dimension_numbers<[1], [0], [0], [1], [0, 0, 1, 1], [], []>} : vector<4x128xbf16>, vector<128x512xbf16>, vector<4x512xf32> -> vector<4x512xf32>
    %14 = vector.extract_strided_slice %13 {offsets = [0, 0], sizes = [4, 32], strides = [1, 1]} : vector<4x512xf32> to vector<4x32xf32>
    %c0_10 = arith.constant 0 : index
    %c0_11 = arith.constant 0 : index
    %15 = vector.load %arg10[%c0_10, %c0_11] : memref<64x32xf32, #tpu.memory_space<vmem>>, vector<4x32xf32>
    tpu.vector_store %arg10[%c0_10, %c0_11], %14 {strides = array<i32>} : memref<64x32xf32, #tpu.memory_space<vmem>>, vector<4x32xf32>,
    %16 = vector.extract_strided_slice %13 {offsets = [0, 32], sizes = [4, 32], strides = [1, 1]} : vector<4x512xf32> to vector<4x32xf32>
    %c4 = arith.constant 4 : index
    %c0_12 = arith.constant 0 : index
    %17 = vector.load %arg10[%c4, %c0_12] : memref<64x32xf32, #tpu.memory_space<vmem>>, vector<4x32xf32>
    tpu.vector_store %arg10[%c4, %c0_12], %16 {strides = array<i32>} : memref<64x32xf32, #tpu.memory_space<vmem>>, vector<4x32xf32>,
    %18 = vector.extract_strided_slice %13 {offsets = [0, 64], sizes = [4, 32], strides = [1, 1]} : vector<4x512xf32> to vector<4x32xf32>
    %c8 = arith.constant 8 : index
    %c0_13 = arith.constant 0 : index
    %19 = vector.load %arg10[%c8, %c0_13] : memref<64x32xf32, #tpu.memory_space<vmem>>, vector<4x32xf32>
    tpu.vector_store %arg10[%c8, %c0_13], %18 {strides = array<i32>} : memref<64x32xf32, #tpu.memory_space<vmem>>, vector<4x32xf32>,
    %20 = vector.extract_strided_slice %13 {offsets = [0, 96], sizes = [4, 32], strides = [1, 1]} : vector<4x512xf32> to vector<4x32xf32>
    %c12 = arith.constant 12 : index
    %c0_14 = arith.constant 0 : index
    %21 = vector.load %arg10[%c12, %c0_14] : memref<64x32xf32, #tpu.memory_space<vmem>>, vector<4x32xf32>
    tpu.vector_store %arg10[%c12, %c0_14], %20 {strides = array<i32>} : memref<64x32xf32, #tpu.memory_space<vmem>>, vector<4x32xf32>,
    %22 = vector.extract_strided_slice %13 {offsets = [0, 128], sizes = [4, 32], strides = [1, 1]} : vector<4x512xf32> to vector<4x32xf32>
    %c16 = arith.constant 16 : index
    %c0_15 = arith.constant 0 : index
    %23 = vector.load %arg10[%c16, %c0_15] : memref<64x32xf32, #tpu.memory_space<vmem>>, vector<4x32xf32>
    tpu.vector_store %arg10[%c16, %c0_15], %22 {strides = array<i32>} : memref<64x32xf32, #tpu.memory_space<vmem>>, vector<4x32xf32>,
    %24 = vector.extract_strided_slice %13 {offsets = [0, 160], sizes = [4, 32], strides = [1, 1]} : vector<4x512xf32> to vector<4x32xf32>
    %c20 = arith.constant 20 : index
    %c0_16 = arith.constant 0 : index
    %25 = vector.load %arg10[%c20, %c0_16] : memref<64x32xf32, #tpu.memory_space<vmem>>, vector<4x32xf32>
    tpu.vector_store %arg10[%c20, %c0_16], %24 {strides = array<i32>} : memref<64x32xf32, #tpu.memory_space<vmem>>, vector<4x32xf32>,
    %26 = vector.extract_strided_slice %13 {offsets = [0, 192], sizes = [4, 32], strides = [1, 1]} : vector<4x512xf32> to vector<4x32xf32>
    %c24 = arith.constant 24 : index
    %c0_17 = arith.constant 0 : index
    %27 = vector.load %arg10[%c24, %c0_17] : memref<64x32xf32, #tpu.memory_space<vmem>>, vector<4x32xf32>
    tpu.vector_store %arg10[%c24, %c0_17], %26 {strides = array<i32>} : memref<64x32xf32, #tpu.memory_space<vmem>>, vector<4x32xf32>,
    %28 = vector.extract_strided_slice %13 {offsets = [0, 224], sizes = [4, 32], strides = [1, 1]} : vector<4x512xf32> to vector<4x32xf32>
    %c28 = arith.constant 28 : index
    %c0_18 = arith.constant 0 : index
    %29 = vector.load %arg10[%c28, %c0_18] : memref<64x32xf32, #tpu.memory_space<vmem>>, vector<4x32xf32>
    tpu.vector_store %arg10[%c28, %c0_18], %28 {strides = array<i32>} : memref<64x32xf32, #tpu.memory_space<vmem>>, vector<4x32xf32>,
    %30 = vector.extract_strided_slice %13 {offsets = [0, 256], sizes = [4, 32], strides = [1, 1]} : vector<4x512xf32> to vector<4x32xf32>
    %c32 = arith.constant 32 : index
    %c0_19 = arith.constant 0 : index
    %31 = vector.load %arg10[%c32, %c0_19] : memref<64x32xf32, #tpu.memory_space<vmem>>, vector<4x32xf32>
    tpu.vector_store %arg10[%c32, %c0_19], %30 {strides = array<i32>} : memref<64x32xf32, #tpu.memory_space<vmem>>, vector<4x32xf32>,
    %32 = vector.extract_strided_slice %13 {offsets = [0, 288], sizes = [4, 32], strides = [1, 1]} : vector<4x512xf32> to vector<4x32xf32>
    %c36 = arith.constant 36 : index
    %c0_20 = arith.constant 0 : index
    %33 = vector.load %arg10[%c36, %c0_20] : memref<64x32xf32, #tpu.memory_space<vmem>>, vector<4x32xf32>
    tpu.vector_store %arg10[%c36, %c0_20], %32 {strides = array<i32>} : memref<64x32xf32, #tpu.memory_space<vmem>>, vector<4x32xf32>,
    %34 = vector.extract_strided_slice %13 {offsets = [0, 320], sizes = [4, 32], strides = [1, 1]} : vector<4x512xf32> to vector<4x32xf32>
    %c40 = arith.constant 40 : index
    %c0_21 = arith.constant 0 : index
    %35 = vector.load %arg10[%c40, %c0_21] : memref<64x32xf32, #tpu.memory_space<vmem>>, vector<4x32xf32>
    tpu.vector_store %arg10[%c40, %c0_21], %34 {strides = array<i32>} : memref<64x32xf32, #tpu.memory_space<vmem>>, vector<4x32xf32>,
    %36 = vector.extract_strided_slice %13 {offsets = [0, 352], sizes = [4, 32], strides = [1, 1]} : vector<4x512xf32> to vector<4x32xf32>
    %c44 = arith.constant 44 : index
    %c0_22 = arith.constant 0 : index
    %37 = vector.load %arg10[%c44, %c0_22] : memref<64x32xf32, #tpu.memory_space<vmem>>, vector<4x32xf32>
    tpu.vector_store %arg10[%c44, %c0_22], %36 {strides = array<i32>} : memref<64x32xf32, #tpu.memory_space<vmem>>, vector<4x32xf32>,
    %38 = vector.extract_strided_slice %13 {offsets = [0, 384], sizes = [4, 32], strides = [1, 1]} : vector<4x512xf32> to vector<4x32xf32>
    %c48 = arith.constant 48 : index
    %c0_23 = arith.constant 0 : index
    %39 = vector.load %arg10[%c48, %c0_23] : memref<64x32xf32, #tpu.memory_space<vmem>>, vector<4x32xf32>
    tpu.vector_store %arg10[%c48, %c0_23], %38 {strides = array<i32>} : memref<64x32xf32, #tpu.memory_space<vmem>>, vector<4x32xf32>,
    %40 = vector.extract_strided_slice %13 {offsets = [0, 416], sizes = [4, 32], strides = [1, 1]} : vector<4x512xf32> to vector<4x32xf32>
    %c52 = arith.constant 52 : index
    %c0_24 = arith.constant 0 : index
    %41 = vector.load %arg10[%c52, %c0_24] : memref<64x32xf32, #tpu.memory_space<vmem>>, vector<4x32xf32>
    tpu.vector_store %arg10[%c52, %c0_24], %40 {strides = array<i32>} : memref<64x32xf32, #tpu.memory_space<vmem>>, vector<4x32xf32>,
    %42 = vector.extract_strided_slice %13 {offsets = [0, 448], sizes = [4, 32], strides = [1, 1]} : vector<4x512xf32> to vector<4x32xf32>
    %c56 = arith.constant 56 : index
    %c0_25 = arith.constant 0 : index
    %43 = vector.load %arg10[%c56, %c0_25] : memref<64x32xf32, #tpu.memory_space<vmem>>, vector<4x32xf32>
    tpu.vector_store %arg10[%c56, %c0_25], %42 {strides = array<i32>} : memref<64x32xf32, #tpu.memory_space<vmem>>, vector<4x32xf32>,
    %44 = vector.extract_strided_slice %13 {offsets = [0, 480], sizes = [4, 32], strides = [1, 1]} : vector<4x512xf32> to vector<4x32xf32>
    %c60 = arith.constant 60 : index
    %c0_26 = arith.constant 0 : index
    %45 = vector.load %arg10[%c60, %c0_26] : memref<64x32xf32, #tpu.memory_space<vmem>>, vector<4x32xf32>
    tpu.vector_store %arg10[%c60, %c0_26], %44 {strides = array<i32>} : memref<64x32xf32, #tpu.memory_space<vmem>>, vector<4x32xf32>,
    %c0_27 = arith.constant 0 : index
    %c0_28 = arith.constant 0 : index
    %46 = vector.load %arg5[%c0_27, %c0_28] : memref<8x64xbf16, #tpu.memory_space<vmem>>, vector<8x64xbf16>
    %c0_29 = arith.constant 0 : index
    %c0_30 = arith.constant 0 : index
    %47 = vector.load %arg10[%c0_29, %c0_30] : memref<64x32xf32, #tpu.memory_space<vmem>>, vector<64x32xf32>
    %48 = arith.truncf %47 : vector<64x32xf32> to vector<64x32xbf16>
    %cst_31 = arith.constant dense<0.000000e+00> : vector<8x32xf32>
    %49 = tpu.matmul %46, %48, %cst_31 {dimension_numbers = #tpu.dot_dimension_numbers<[1], [0], [0], [1], [0, 0, 1, 1], [], []>} : vector<8x64xbf16>, vector<64x32xbf16>, vector<8x32xf32> -> vector<8x32xf32>
    %c0_32 = arith.constant 0 : index
    %c0_33 = arith.constant 0 : index
    %50 = vector.load %arg6[%c0_32, %c0_33] : memref<8x1xf32, #tpu.memory_space<vmem>>, vector<8x1xf32>
    %51 = vector.broadcast %50 : vector<8x1xf32> to vector<8x32xf32>
    %52 = arith.addf %49, %51 : vector<8x32xf32>
    %cst_34 = arith.constant 0.000000e+00 : f32
    %53 = vector.broadcast %cst_34 : f32 to vector<8x32xf32>
    %54 = arith.cmpf ogt, %52, %53 : vector<8x32xf32>
    %cst_35 = arith.constant 1.000000e-01 : f32
    %55 = vector.broadcast %cst_35 : f32 to vector<8x32xf32>
    %56 = arith.mulf %55, %52 : vector<8x32xf32>
    %57 = arith.select %54, %52, %56 : vector<8x32xi1>, vector<8x32xf32>
    %58 = vector.extract_strided_slice %57 {offsets = [0, 0], sizes = [1, 16], strides = [1, 1]} : vector<8x32xf32> to vector<1x16xf32>
    %c0_36 = arith.constant 0 : index
    %c0_37 = arith.constant 0 : index
    %59 = vector.load %arg11[%c0_36, %c0_37] : memref<2x128xf32, #tpu.memory_space<vmem>>, vector<1x16xf32>
    tpu.vector_store %arg11[%c0_36, %c0_37], %58 {strides = array<i32>} : memref<2x128xf32, #tpu.memory_space<vmem>>, vector<1x16xf32>,
    %60 = vector.extract_strided_slice %57 {offsets = [1, 0], sizes = [1, 16], strides = [1, 1]} : vector<8x32xf32> to vector<1x16xf32>
    %c0_38 = arith.constant 0 : index
    %c16_39 = arith.constant 16 : index
    %61 = vector.load %arg11[%c0_38, %c16_39] : memref<2x128xf32, #tpu.memory_space<vmem>>, vector<1x16xf32>
    tpu.vector_store %arg11[%c0_38, %c16_39], %60 {strides = array<i32>} : memref<2x128xf32, #tpu.memory_space<vmem>>, vector<1x16xf32>,
    %62 = vector.extract_strided_slice %57 {offsets = [2, 0], sizes = [1, 16], strides = [1, 1]} : vector<8x32xf32> to vector<1x16xf32>
    %c0_40 = arith.constant 0 : index
    %c32_41 = arith.constant 32 : index
    %63 = vector.load %arg11[%c0_40, %c32_41] : memref<2x128xf32, #tpu.memory_space<vmem>>, vector<1x16xf32>
    tpu.vector_store %arg11[%c0_40, %c32_41], %62 {strides = array<i32>} : memref<2x128xf32, #tpu.memory_space<vmem>>, vector<1x16xf32>,
    %64 = vector.extract_strided_slice %57 {offsets = [3, 0], sizes = [1, 16], strides = [1, 1]} : vector<8x32xf32> to vector<1x16xf32>
    %c0_42 = arith.constant 0 : index
    %c48_43 = arith.constant 48 : index
    %65 = vector.load %arg11[%c0_42, %c48_43] : memref<2x128xf32, #tpu.memory_space<vmem>>, vector<1x16xf32>
    tpu.vector_store %arg11[%c0_42, %c48_43], %64 {strides = array<i32>} : memref<2x128xf32, #tpu.memory_space<vmem>>, vector<1x16xf32>,
    %66 = vector.extract_strided_slice %57 {offsets = [4, 0], sizes = [1, 16], strides = [1, 1]} : vector<8x32xf32> to vector<1x16xf32>
    %c0_44 = arith.constant 0 : index
    %c64 = arith.constant 64 : index
    %67 = vector.load %arg11[%c0_44, %c64] : memref<2x128xf32, #tpu.memory_space<vmem>>, vector<1x16xf32>
    tpu.vector_store %arg11[%c0_44, %c64], %66 {strides = array<i32>} : memref<2x128xf32, #tpu.memory_space<vmem>>, vector<1x16xf32>,
    %68 = vector.extract_strided_slice %57 {offsets = [5, 0], sizes = [1, 16], strides = [1, 1]} : vector<8x32xf32> to vector<1x16xf32>
    %c0_45 = arith.constant 0 : index
    %c80 = arith.constant 80 : index
    %69 = vector.load %arg11[%c0_45, %c80] : memref<2x128xf32, #tpu.memory_space<vmem>>, vector<1x16xf32>
    tpu.vector_store %arg11[%c0_45, %c80], %68 {strides = array<i32>} : memref<2x128xf32, #tpu.memory_space<vmem>>, vector<1x16xf32>,
    %70 = vector.extract_strided_slice %57 {offsets = [6, 0], sizes = [1, 16], strides = [1, 1]} : vector<8x32xf32> to vector<1x16xf32>
    %c0_46 = arith.constant 0 : index
    %c96 = arith.constant 96 : index
    %71 = vector.load %arg11[%c0_46, %c96] : memref<2x128xf32, #tpu.memory_space<vmem>>, vector<1x16xf32>
    tpu.vector_store %arg11[%c0_46, %c96], %70 {strides = array<i32>} : memref<2x128xf32, #tpu.memory_space<vmem>>, vector<1x16xf32>,
    %72 = vector.extract_strided_slice %57 {offsets = [7, 0], sizes = [1, 16], strides = [1, 1]} : vector<8x32xf32> to vector<1x16xf32>
    %c0_47 = arith.constant 0 : index
    %c112 = arith.constant 112 : index
    %73 = vector.load %arg11[%c0_47, %c112] : memref<2x128xf32, #tpu.memory_space<vmem>>, vector<1x16xf32>
    tpu.vector_store %arg11[%c0_47, %c112], %72 {strides = array<i32>} : memref<2x128xf32, #tpu.memory_space<vmem>>, vector<1x16xf32>,
    %74 = vector.extract_strided_slice %57 {offsets = [0, 16], sizes = [1, 16], strides = [1, 1]} : vector<8x32xf32> to vector<1x16xf32>
    %c1 = arith.constant 1 : index
    %c0_48 = arith.constant 0 : index
    %75 = vector.load %arg11[%c1, %c0_48] : memref<2x128xf32, #tpu.memory_space<vmem>>, vector<1x16xf32>
    tpu.vector_store %arg11[%c1, %c0_48], %74 {strides = array<i32>} : memref<2x128xf32, #tpu.memory_space<vmem>>, vector<1x16xf32>,
    %76 = vector.extract_strided_slice %57 {offsets = [1, 16], sizes = [1, 16], strides = [1, 1]} : vector<8x32xf32> to vector<1x16xf32>
    %c1_49 = arith.constant 1 : index
    %c16_50 = arith.constant 16 : index
    %77 = vector.load %arg11[%c1_49, %c16_50] : memref<2x128xf32, #tpu.memory_space<vmem>>, vector<1x16xf32>
    tpu.vector_store %arg11[%c1_49, %c16_50], %76 {strides = array<i32>} : memref<2x128xf32, #tpu.memory_space<vmem>>, vector<1x16xf32>,
    %78 = vector.extract_strided_slice %57 {offsets = [2, 16], sizes = [1, 16], strides = [1, 1]} : vector<8x32xf32> to vector<1x16xf32>
    %c1_51 = arith.constant 1 : index
    %c32_52 = arith.constant 32 : index
    %79 = vector.load %arg11[%c1_51, %c32_52] : memref<2x128xf32, #tpu.memory_space<vmem>>, vector<1x16xf32>
    tpu.vector_store %arg11[%c1_51, %c32_52], %78 {strides = array<i32>} : memref<2x128xf32, #tpu.memory_space<vmem>>, vector<1x16xf32>,
    %80 = vector.extract_strided_slice %57 {offsets = [3, 16], sizes = [1, 16], strides = [1, 1]} : vector<8x32xf32> to vector<1x16xf32>
    %c1_53 = arith.constant 1 : index
    %c48_54 = arith.constant 48 : index
    %81 = vector.load %arg11[%c1_53, %c48_54] : memref<2x128xf32, #tpu.memory_space<vmem>>, vector<1x16xf32>
    tpu.vector_store %arg11[%c1_53, %c48_54], %80 {strides = array<i32>} : memref<2x128xf32, #tpu.memory_space<vmem>>, vector<1x16xf32>,
    %82 = vector.extract_strided_slice %57 {offsets = [4, 16], sizes = [1, 16], strides = [1, 1]} : vector<8x32xf32> to vector<1x16xf32>
    %c1_55 = arith.constant 1 : index
    %c64_56 = arith.constant 64 : index
    %83 = vector.load %arg11[%c1_55, %c64_56] : memref<2x128xf32, #tpu.memory_space<vmem>>, vector<1x16xf32>
    tpu.vector_store %arg11[%c1_55, %c64_56], %82 {strides = array<i32>} : memref<2x128xf32, #tpu.memory_space<vmem>>, vector<1x16xf32>,
    %84 = vector.extract_strided_slice %57 {offsets = [5, 16], sizes = [1, 16], strides = [1, 1]} : vector<8x32xf32> to vector<1x16xf32>
    %c1_57 = arith.constant 1 : index
    %c80_58 = arith.constant 80 : index
    %85 = vector.load %arg11[%c1_57, %c80_58] : memref<2x128xf32, #tpu.memory_space<vmem>>, vector<1x16xf32>
    tpu.vector_store %arg11[%c1_57, %c80_58], %84 {strides = array<i32>} : memref<2x128xf32, #tpu.memory_space<vmem>>, vector<1x16xf32>,
    %86 = vector.extract_strided_slice %57 {offsets = [6, 16], sizes = [1, 16], strides = [1, 1]} : vector<8x32xf32> to vector<1x16xf32>
    %c1_59 = arith.constant 1 : index
    %c96_60 = arith.constant 96 : index
    %87 = vector.load %arg11[%c1_59, %c96_60] : memref<2x128xf32, #tpu.memory_space<vmem>>, vector<1x16xf32>
    tpu.vector_store %arg11[%c1_59, %c96_60], %86 {strides = array<i32>} : memref<2x128xf32, #tpu.memory_space<vmem>>, vector<1x16xf32>,
    %88 = vector.extract_strided_slice %57 {offsets = [7, 16], sizes = [1, 16], strides = [1, 1]} : vector<8x32xf32> to vector<1x16xf32>
    %c1_61 = arith.constant 1 : index
    %c112_62 = arith.constant 112 : index
    %89 = vector.load %arg11[%c1_61, %c112_62] : memref<2x128xf32, #tpu.memory_space<vmem>>, vector<1x16xf32>
    tpu.vector_store %arg11[%c1_61, %c112_62], %88 {strides = array<i32>} : memref<2x128xf32, #tpu.memory_space<vmem>>, vector<1x16xf32>,
    %c0_63 = arith.constant 0 : index
    %c0_64 = arith.constant 0 : index
    %90 = vector.load %arg11[%c0_63, %c0_64] : memref<2x128xf32, #tpu.memory_space<vmem>>, vector<2x128xf32>
    %91 = arith.truncf %90 : vector<2x128xf32> to vector<2x128xbf16>
    %c0_65 = arith.constant 0 : index
    %c0_66 = arith.constant 0 : index
    %92 = vector.load %arg7[%c0_65, %c0_66] : memref<128x512xbf16, #tpu.memory_space<vmem>>, vector<128x512xbf16>
    %cst_67 = arith.constant dense<0.000000e+00> : vector<2x512xf32>
    %93 = tpu.matmul %91, %92, %cst_67 {dimension_numbers = #tpu.dot_dimension_numbers<[1], [0], [0], [1], [0, 0, 1, 1], [], []>} : vector<2x128xbf16>, vector<128x512xbf16>, vector<2x512xf32> -> vector<2x512xf32>
    %c0_68 = arith.constant 0 : index
    %c0_69 = arith.constant 0 : index
    %94 = vector.load %arg8[%c0_68, %c0_69] : memref<1x512xf32, #tpu.memory_space<vmem>>, vector<1x512xf32>
    %95 = vector.broadcast %94 : vector<1x512xf32> to vector<2x512xf32>
    %96 = arith.addf %93, %95 : vector<2x512xf32>
    %c0_70 = arith.constant 0 : index
    %c0_71 = arith.constant 0 : index
    %97 = vector.load %arg9[%c0_70, %c0_71] : memref<2x512xf32, #tpu.memory_space<vmem>>, vector<2x512xf32>
    tpu.vector_store %arg9[%c0_70, %c0_71], %96 {strides = array<i32>} : memref<2x512xf32, #tpu.memory_space<vmem>>, vector<2x512xf32>,
    return
  }
  func.func @transform_0(%arg0: i32) -> (i32, i32) {
    %c0_i32 = arith.constant 0 : i32
    %c0_i32_0 = arith.constant 0 : i32
    %c0_i32_1 = arith.constant 0 : i32
    return %c0_i32, %c0_i32_0 : i32, i32
  }
  func.func @transform_1(%arg0: i32) -> (i32, i32) {
    %c0_i32 = arith.constant 0 : i32
    %c0_i32_0 = arith.constant 0 : i32
    %c0_i32_1 = arith.constant 0 : i32
    return %c0_i32, %c0_i32_0 : i32, i32
  }
  func.func @transform_2(%arg0: i32) -> (i32, i32) {
    %c0_i32 = arith.constant 0 : i32
    %c0_i32_0 = arith.constant 0 : i32
    %c0_i32_1 = arith.constant 0 : i32
    return %c0_i32, %c0_i32_0 : i32, i32
  }
  func.func @transform_3(%arg0: i32) -> (i32, i32) {
    %c0_i32 = arith.constant 0 : i32
    %c0_i32_0 = arith.constant 0 : i32
    %c0_i32_1 = arith.constant 0 : i32
    return %c0_i32, %c0_i32_0 : i32, i32
  }
  func.func @transform_4(%arg0: i32) -> (i32, i32) {
    %c0_i32 = arith.constant 0 : i32
    %c0_i32_0 = arith.constant 0 : i32
    %c0_i32_1 = arith.constant 0 : i32
    return %c0_i32, %c0_i32_0 : i32, i32
  }
  func.func @transform_5(%arg0: i32) -> (i32, i32) {
    %c0_i32 = arith.constant 0 : i32
    %c0_i32_0 = arith.constant 0 : i32
    %c0_i32_1 = arith.constant 0 : i32
    return %c0_i32, %c0_i32_0 : i32, i32
  }
  func.func @transform_6(%arg0: i32) -> (i32, i32) {
    %c0_i32 = arith.constant 0 : i32
    %c0_i32_0 = arith.constant 0 : i32
    %c0_i32_1 = arith.constant 0 : i32
    return %c0_i32, %c0_i32_0 : i32, i32
  }
  func.func @transform_7(%arg0: i32) -> (i32, i32) {
    %c0_i32 = arith.constant 0 : i32
    %c0_i32_0 = arith.constant 0 : i32
    %c0_i32_1 = arith.constant 0 : i32
    return %c0_i32, %c0_i32_0 : i32, i32
  }
  func.func @transform_8(%arg0: i32) -> (i32, i32) {
    %c0_i32 = arith.constant 0 : i32
    %c0_i32_0 = arith.constant 0 : i32
    %c0_i32_1 = arith.constant 0 : i32
    return %c0_i32, %c0_i32_0 : i32, i32
  }
}

</mosaic_0001>

<llo_original>
// kernel: encoder_forward.1
$region0: #{encoder_forward.1}
  #allocation0 [shape = 'u32[]', space=smem, size = 0x4, offset = 0x4, fixed_abs, tag = 'smem constant byte address 0x4 - core index']
  #allocation1 [shape = 'u32[144,128]{1,0:T(1,128)}', space=vmem, size = 0x12000, scoped, tag = 'internal scratch']
  #allocation2 [shape = 'f32[64,32]{1,0:T(8,128)}', space=vmem, size = 0x8000, scoped, tag = 'scratch operand']
  #allocation3 [shape = 'f32[2,128]{1,0:T(2,128)}', space=vmem, size = 0x400, scoped, tag = 'scratch operand']
  %s0 = inlined_call_operand.vmem [shape: bf16[48,128], index: 0, kind: input, shape index: {}]
  %s1 = inlined_call_operand.vmem [shape: bf16[4,48], index: 1, kind: input, shape index: {}]
  %s2 = inlined_call_operand.vmem [shape: f32[4,1], index: 2, kind: input, shape index: {}]
  %s3 = inlined_call_operand.vmem [shape: bf16[128,512], index: 3, kind: input, shape index: {}]
  %s4 = inlined_call_operand.vmem [shape: bf16[8,64], index: 4, kind: input, shape index: {}]
  %s5 = inlined_call_operand.vmem [shape: f32[8,1], index: 5, kind: input, shape index: {}]
  %s6 = inlined_call_operand.vmem [shape: bf16[128,512], index: 6, kind: input, shape index: {}]
  %s7 = inlined_call_operand.vmem [shape: f32[1,512], index: 7, kind: input, shape index: {}]
  %s8 = inlined_call_operand.hbm [shape: f32[2,512], index: 8, kind: output, shape index: {}]
  %s9 = sld [smem:[#allocation0]]
  $region42: #{encoder_forward.1} parent=0
    _
  %s11 = ssub.s32 1, %s9
  %s12 = scalar_select 0, %s11, %s9
  $region1: #{encoder_forward.1} parent=0
    #allocation4 [shape = 'u8[4096]{0}', space=vmem, size = 0x1000, scoped, tag = 'output window, operand 0, single buffered']
    #allocation5 [shape = 's32[1]{0}', space=sflag, size = 0x4, scoped, tag = 'scoped memory for encoder_forward.1']
    %13 = vsyncpa [#allocation5], 0
    // Predicated region
    $region2: #{encoder_forward.1} parent=1 // pred_check
      _
    $region3: #{encoder_forward.1} parent=1 // pred_check_branch
      %15 = sbr.rel (0) target = $region5
    $region4: #{encoder_forward.1} parent=1 // pred_region
      _
    $region5: #{encoder_forward.1} parent=1 // pred_fallthru
      _
    // Predicated region
    $region6: #{encoder_forward.1} parent=1 // pred_check
      _
    $region7: #{encoder_forward.1} parent=1 // pred_check_branch
      %17 = sbr.rel (0) target = $region9
    $region8: #{encoder_forward.1} parent=1 // pred_region
      _
    $region9: #{encoder_forward.1} parent=1 // pred_fallthru
      _
    // Predicated region
    $region10: #{encoder_forward.1} parent=1 // pred_check
      _
    $region11: #{encoder_forward.1} parent=1 // pred_check_branch
      %19 = sbr.rel (0) target = $region13
    $region12: #{encoder_forward.1} parent=1 // pred_region
      _
    $region13: #{encoder_forward.1} parent=1 // pred_fallthru
      _
    // Predicated region
    $region14: #{encoder_forward.1} parent=1 // pred_check
      _
    $region15: #{encoder_forward.1} parent=1 // pred_check_branch
      %21 = sbr.rel (0) target = $region17
    $region16: #{encoder_forward.1} parent=1 // pred_region
      _
    $region17: #{encoder_forward.1} parent=1 // pred_fallthru
      _
    // Predicated region
    $region18: #{encoder_forward.1} parent=1 // pred_check
      _
    $region19: #{encoder_forward.1} parent=1 // pred_check_branch
      %23 = sbr.rel (0) target = $region21
    $region20: #{encoder_forward.1} parent=1 // pred_region
      _
    $region21: #{encoder_forward.1} parent=1 // pred_fallthru
      _
    // Predicated region
    $region22: #{encoder_forward.1} parent=1 // pred_check
      _
    $region23: #{encoder_forward.1} parent=1 // pred_check_branch
      %25 = sbr.rel (0) target = $region25
    $region24: #{encoder_forward.1} parent=1 // pred_region
      _
    $region25: #{encoder_forward.1} parent=1 // pred_fallthru
      _
    // Predicated region
    $region26: #{encoder_forward.1} parent=1 // pred_check
      _
    $region27: #{encoder_forward.1} parent=1 // pred_check_branch
      %27 = sbr.rel (0) target = $region29
    $region28: #{encoder_forward.1} parent=1 // pred_region
      _
    $region29: #{encoder_forward.1} parent=1 // pred_fallthru
      _
    // Predicated region
    $region30: #{encoder_forward.1} parent=1 // pred_check
      _
    $region31: #{encoder_forward.1} parent=1 // pred_check_branch
      %29 = sbr.rel (0) target = $region33
    $region32: #{encoder_forward.1} parent=1 // pred_region
      _
    $region33: #{encoder_forward.1} parent=1 // pred_fallthru
      _
    %v31 = vld [vmem:[%s1] sm:$0x3]
    %v32 = vld [vmem:[%s0] sm:$0xf]
    %v33 = vld [vmem:[%s0 + $0x4] sm:$0xf]
    %v34 = vld [vmem:[%s0 + $0x8] sm:$0xf]
    %v35 = vld [vmem:[%s0 + $0xc] sm:$0xf]
    %v36 = vld [vmem:[%s0 + $0x10] sm:$0xf]
    %v37 = vld [vmem:[%s0 + $0x14] sm:$0xf]
    %v38 = vld [vmem:[%s2] sm:$0xf]
    %40 = vset.pattern.permute.xlu0 0
    %41 = vperm.xlu0 %40, %v38
    %v42 = vpop.permute.xlu0 %41
    %v50 = vunpack.c.l.b16 %v32
    %v51 = vunpack.c.l.b16 %v33
    %v52 = vunpack.c.l.b16 %v34
    %v53 = vunpack.c.l.b16 %v35
    %v54 = vunpack.c.l.b16 %v36
    %v55 = vunpack.c.l.b16 %v37
    %v56 = vpack.c.b16 %v51, %v50
    %v57 = vpack.c.b16 %v53, %v52
    %v58 = vpack.c.b16 %v55, %v54
    %vm62 = vcmask 392192
    %v64 = vsel %vm62, %v31, 0
    %66 = vmatprep.subr.bf16.mxu0 0
    %67 = vmatpush1.bf16.msra.mxu0 %v56
    %68 = vmatprep.subr.bf16.mxu0 0
    %69 = vmatpush1.bf16.msra.mxu0 %v57
    %70 = vmatprep.subr.bf16.mxu0 0
    %71 = vmatpush1.bf16.msra.mxu0 %v58
    %72 = vmatprep.subr.bf16.mxu0 0
    %73 = vmatpush1.bf16.msra.mxu0 0
    %74 = vmatprep.subr.bf16.mxu0 0
    %75 = vmatpush1.bf16.msra.mxu0 0
    %76 = vmatprep.subr.bf16.mxu0 0
    %77 = vmatpush1.bf16.msra.mxu0 0
    %78 = vmatprep.subr.bf16.mxu0 0
    %79 = vmatpush1.bf16.msra.mxu0 0
    %80 = vmatprep.subr.bf16.mxu0 0
    %81 = vmatpush1.bf16.msra.mxu0 0
    %82 = vmatprep.subr.bf16.mxu0 0
    %83 = vmatpush1.bf16.msra.mxu0 0
    %84 = vmatprep.subr.bf16.mxu0 0
    %85 = vmatpush1.bf16.msra.mxu0 0
    %86 = vmatprep.subr.bf16.mxu0 0
    %87 = vmatpush1.bf16.msra.mxu0 0
    %88 = vmatprep.subr.bf16.mxu0 0
    %89 = vmatpush1.bf16.msra.mxu0 0
    %90 = vmatprep.subr.bf16.mxu0 0
    %91 = vmatpush1.bf16.msra.mxu0 0
    %92 = vmatprep.subr.bf16.mxu0 0
    %93 = vmatpush1.bf16.msra.mxu0 0
    %94 = vmatprep.subr.bf16.mxu0 0
    %95 = vmatpush1.bf16.msra.mxu0 0
    %96 = vmatprep.subr.bf16.mxu0 0
    %97 = vmatpush1.bf16.msra.mxu0 0
    %98 = vmatprep.mubr.bf16.mxu0 0
    %99 = vmatmul.mubr.bf16.gmra.mrb[0].mxu0 %v64
    %v100 = vpop.f32.mrb[0].mxu0
    %v101 = vadd.f32 %v42, %v100
    %v102 = vpop.f32.mrb[0].mxu0
    %v103 = vpop.f32.mrb[0].mxu0
    %v104 = vpop.f32.mrb[0].mxu0
    %105 = vdwg.mxu0
    %vm106 = vcmp.gt.f32.partialorder %v101, 0.0
    %v107 = vmul.f32 %v101, 0.1
    %v108 = vsel %vm106, %v101, %v107
    %v109 = vpack.c.bf16 %v108, %v108
    %v110 = vld [vmem:[%s3] sm:$0xff]
    %v111 = vld [vmem:[%s3 + $0x8] sm:$0xff]
    %v112 = vld [vmem:[%s3 + $0x10] sm:$0xff]
    %v113 = vld [vmem:[%s3 + $0x18] sm:$0xff]
    %v114 = vld [vmem:[%s3 + $0x20] sm:$0xff]
    %v115 = vld [vmem:[%s3 + $0x28] sm:$0xff]
    %v116 = vld [vmem:[%s3 + $0x30] sm:$0xff]
    %v117 = vld [vmem:[%s3 + $0x38] sm:$0xff]
    %v118 = vld [vmem:[%s3 + $0x40] sm:$0xff]
    %v119 = vld [vmem:[%s3 + $0x48] sm:$0xff]
    %v120 = vld [vmem:[%s3 + $0x50] sm:$0xff]
    %v121 = vld [vmem:[%s3 + $0x58] sm:$0xff]
    %v122 = vld [vmem:[%s3 + $0x60] sm:$0xff]
    %v123 = vld [vmem:[%s3 + $0x68] sm:$0xff]
    %v124 = vld [vmem:[%s3 + $0x70] sm:$0xff]
    %v125 = vld [vmem:[%s3 + $0x78] sm:$0xff]
    %v126 = vld [vmem:[%s3 + $0x80] sm:$0xff]
    %v127 = vld [vmem:[%s3 + $0x88] sm:$0xff]
    %v128 = vld [vmem:[%s3 + $0x90] sm:$0xff]
    %v129 = vld [vmem:[%s3 + $0x98] sm:$0xff]
    %v130 = vld [vmem:[%s3 + $0xa0] sm:$0xff]
    %v131 = vld [vmem:[%s3 + $0xa8] sm:$0xff]
    %v132 = vld [vmem:[%s3 + $0xb0] sm:$0xff]
    %v133 = vld [vmem:[%s3 + $0xb8] sm:$0xff]
    %v134 = vld [vmem:[%s3 + $0xc0] sm:$0xff]
    %v135 = vld [vmem:[%s3 + $0xc8] sm:$0xff]
    %v136 = vld [vmem:[%s3 + $0xd0] sm:$0xff]
    %v137 = vld [vmem:[%s3 + $0xd8] sm:$0xff]
    %v138 = vld [vmem:[%s3 + $0xe0] sm:$0xff]
    %v139 = vld [vmem:[%s3 + $0xe8] sm:$0xff]
    %v140 = vld [vmem:[%s3 + $0xf0] sm:$0xff]
    %v141 = vld [vmem:[%s3 + $0xf8] sm:$0xff]
    %v174 = vunpack.c.l.b16 %v110
    %v175 = vunpack.c.h.b16 %v110
    %v176 = vunpack.c.l.b16 %v111
    %v177 = vunpack.c.h.b16 %v111
    %v178 = vunpack.c.l.b16 %v112
    %v179 = vunpack.c.h.b16 %v112
    %v180 = vunpack.c.l.b16 %v113
    %v181 = vunpack.c.h.b16 %v113
    %v182 = vunpack.c.l.b16 %v114
    %v183 = vunpack.c.h.b16 %v114
    %v184 = vunpack.c.l.b16 %v115
    %v185 = vunpack.c.h.b16 %v115
    %v186 = vunpack.c.l.b16 %v116
    %v187 = vunpack.c.h.b16 %v116
    %v188 = vunpack.c.l.b16 %v117
    %v189 = vunpack.c.h.b16 %v117
    %v190 = vunpack.c.l.b16 %v118
    %v191 = vunpack.c.h.b16 %v118
    %v192 = vunpack.c.l.b16 %v119
    %v193 = vunpack.c.h.b16 %v119
    %v194 = vunpack.c.l.b16 %v120
    %v195 = vunpack.c.h.b16 %v120
    %v196 = vunpack.c.l.b16 %v121
    %v197 = vunpack.c.h.b16 %v121
    %v198 = vunpack.c.l.b16 %v122
    %v199 = vunpack.c.h.b16 %v122
    %v200 = vunpack.c.l.b16 %v123
    %v201 = vunpack.c.h.b16 %v123
    %v202 = vunpack.c.l.b16 %v124
    %v203 = vunpack.c.h.b16 %v124
    %v204 = vunpack.c.l.b16 %v125
    %v205 = vunpack.c.h.b16 %v125
    %v206 = vunpack.c.l.b16 %v126
    %v207 = vunpack.c.h.b16 %v126
    %v208 = vunpack.c.l.b16 %v127
    %v209 = vunpack.c.h.b16 %v127
    %v210 = vunpack.c.l.b16 %v128
    %v211 = vunpack.c.h.b16 %v128
    %v212 = vunpack.c.l.b16 %v129
    %v213 = vunpack.c.h.b16 %v129
    %v214 = vunpack.c.l.b16 %v130
    %v215 = vunpack.c.h.b16 %v130
    %v216 = vunpack.c.l.b16 %v131
    %v217 = vunpack.c.h.b16 %v131
    %v218 = vunpack.c.l.b16 %v132
    %v219 = vunpack.c.h.b16 %v132
    %v220 = vunpack.c.l.b16 %v133
    %v221 = vunpack.c.h.b16 %v133
    %v222 = vunpack.c.l.b16 %v134
    %v223 = vunpack.c.h.b16 %v134
    %v224 = vunpack.c.l.b16 %v135
    %v225 = vunpack.c.h.b16 %v135
    %v226 = vunpack.c.l.b16 %v136
    %v227 = vunpack.c.h.b16 %v136
    %v228 = vunpack.c.l.b16 %v137
    %v229 = vunpack.c.h.b16 %v137
    %v230 = vunpack.c.l.b16 %v138
    %v231 = vunpack.c.h.b16 %v138
    %v232 = vunpack.c.l.b16 %v139
    %v233 = vunpack.c.h.b16 %v139
    %v234 = vunpack.c.l.b16 %v140
    %v235 = vunpack.c.h.b16 %v140
    %v236 = vunpack.c.l.b16 %v141
    %v237 = vunpack.c.h.b16 %v141
    %v238 = vpack.c.b16 %v178, %v174
    %v239 = vpack.c.b16 %v179, %v175
    %v240 = vpack.c.b16 %v180, %v176
    %v241 = vpack.c.b16 %v181, %v177
    %v242 = vpack.c.b16 %v186, %v182
    %v243 = vpack.c.b16 %v187, %v183
    %v244 = vpack.c.b16 %v188, %v184
    %v245 = vpack.c.b16 %v189, %v185
    %v246 = vpack.c.b16 %v194, %v190
    %v247 = vpack.c.b16 %v195, %v191
    %v248 = vpack.c.b16 %v196, %v192
    %v249 = vpack.c.b16 %v197, %v193
    %v250 = vpack.c.b16 %v202, %v198
    %v251 = vpack.c.b16 %v203, %v199
    %v252 = vpack.c.b16 %v204, %v200
    %v253 = vpack.c.b16 %v205, %v201
    %v254 = vpack.c.b16 %v210, %v206
    %v255 = vpack.c.b16 %v211, %v207
    %v256 = vpack.c.b16 %v212, %v208
    %v257 = vpack.c.b16 %v213, %v209
    %v258 = vpack.c.b16 %v218, %v214
    %v259 = vpack.c.b16 %v219, %v215
    %v260 = vpack.c.b16 %v220, %v216
    %v261 = vpack.c.b16 %v221, %v217
    %v262 = vpack.c.b16 %v226, %v222
    %v263 = vpack.c.b16 %v227, %v223
    %v264 = vpack.c.b16 %v228, %v224
    %v265 = vpack.c.b16 %v229, %v225
    %v266 = vpack.c.b16 %v234, %v230
    %v267 = vpack.c.b16 %v235, %v231
    %v268 = vpack.c.b16 %v236, %v232
    %v269 = vpack.c.b16 %v237, %v233
    %302 = vmatprep.subr.bf16.mxu0 %v239
    %303 = vmatpush1.bf16.msra.mxu0 %v238
    %304 = vmatprep.subr.bf16.mxu0 %v243
    %305 = vmatpush1.bf16.msra.mxu0 %v242
    %306 = vmatprep.subr.bf16.mxu0 %v247
    %307 = vmatpush1.bf16.msra.mxu0 %v246
    %308 = vmatprep.subr.bf16.mxu0 %v251
    %309 = vmatpush1.bf16.msra.mxu0 %v250
    %310 = vmatprep.subr.bf16.mxu0 %v255
    %311 = vmatpush1.bf16.msra.mxu0 %v254
    %312 = vmatprep.subr.bf16.mxu0 %v259
    %313 = vmatpush1.bf16.msra.mxu0 %v258
    %314 = vmatprep.subr.bf16.mxu0 %v263
    %315 = vmatpush1.bf16.msra.mxu0 %v262
    %316 = vmatprep.subr.bf16.mxu0 %v267
    %317 = vmatpush1.bf16.msra.mxu0 %v266
    %318 = vmatprep.subr.bf16.mxu0 0
    %319 = vmatpush1.bf16.msra.mxu0 0
    %320 = vmatprep.subr.bf16.mxu0 0
    %321 = vmatpush1.bf16.msra.mxu0 0
    %322 = vmatprep.subr.bf16.mxu0 0
    %323 = vmatpush1.bf16.msra.mxu0 0
    %324 = vmatprep.subr.bf16.mxu0 0
    %325 = vmatpush1.bf16.msra.mxu0 0
    %326 = vmatprep.subr.bf16.mxu0 0
    %327 = vmatpush1.bf16.msra.mxu0 0
    %328 = vmatprep.subr.bf16.mxu0 0
    %329 = vmatpush1.bf16.msra.mxu0 0
    %330 = vmatprep.subr.bf16.mxu0 0
    %331 = vmatpush1.bf16.msra.mxu0 0
    %332 = vmatprep.subr.bf16.mxu0 0
    %333 = vmatpush1.bf16.msra.mxu0 0
    %334 = vmatprep.mubr.bf16.mxu0 0
    %335 = vmatmul.mubr.bf16.gmra.mrb[0].mxu0 %v109
    %v336 = vpop.f32.mrb[0].mxu0
    %v337 = vadd.f32 0.0, %v336
    %v338 = vpop.f32.mrb[0].mxu0
    %v339 = vadd.f32 0.0, %v338
    %v340 = vpop.f32.mrb[0].mxu0
    %v341 = vpop.f32.mrb[0].mxu0
    %342 = vdwg.mxu0
    %343 = vmatprep.subr.bf16.mxu0 %v241
    %344 = vmatpush1.bf16.msra.mxu0 %v240
    %345 = vmatprep.subr.bf16.mxu0 %v245
    %346 = vmatpush1.bf16.msra.mxu0 %v244
    %347 = vmatprep.subr.bf16.mxu0 %v249
    %348 = vmatpush1.bf16.msra.mxu0 %v248
    %349 = vmatprep.subr.bf16.mxu0 %v253
    %350 = vmatpush1.bf16.msra.mxu0 %v252
    %351 = vmatprep.subr.bf16.mxu0 %v257
    %352 = vmatpush1.bf16.msra.mxu0 %v256
    %353 = vmatprep.subr.bf16.mxu0 %v261
    %354 = vmatpush1.bf16.msra.mxu0 %v260
    %355 = vmatprep.subr.bf16.mxu0 %v265
    %356 = vmatpush1.bf16.msra.mxu0 %v264
    %357 = vmatprep.subr.bf16.mxu0 %v269
    %358 = vmatpush1.bf16.msra.mxu0 %v268
    %359 = vmatprep.subr.bf16.mxu0 0
    %360 = vmatpush1.bf16.msra.mxu0 0
    %361 = vmatprep.subr.bf16.mxu0 0
    %362 = vmatpush1.bf16.msra.mxu0 0
    %363 = vmatprep.subr.bf16.mxu0 0
    %364 = vmatpush1.bf16.msra.mxu0 0
    %365 = vmatprep.subr.bf16.mxu0 0
    %366 = vmatpush1.bf16.msra.mxu0 0
    %367 = vmatprep.subr.bf16.mxu0 0
    %368 = vmatpush1.bf16.msra.mxu0 0
    %369 = vmatprep.subr.bf16.mxu0 0
    %370 = vmatpush1.bf16.msra.mxu0 0
    %371 = vmatprep.subr.bf16.mxu0 0
    %372 = vmatpush1.bf16.msra.mxu0 0
    %373 = vmatprep.subr.bf16.mxu0 0
    %374 = vmatpush1.bf16.msra.mxu0 0
    %375 = vmatprep.mubr.bf16.mxu0 0
    %376 = vmatmul.mubr.bf16.gmra.mrb[0].mxu0 %v109
    %v377 = vpop.f32.mrb[0].mxu0
    %v378 = vadd.f32 0.0, %v377
    %v379 = vpop.f32.mrb[0].mxu0
    %v380 = vadd.f32 0.0, %v379
    %v381 = vpop.f32.mrb[0].mxu0
    %v382 = vpop.f32.mrb[0].mxu0
    %383 = vdwg.mxu0
    %vm384 = vcmask 257024
    %385 = vst.msk [vmem:[#allocation2] sm:$0xf] %vm384, %v337
    %387 = vrot.lane.b32.xlu0 %v337, 96
    %v388 = vpop.permute.xlu0 %387
    %390 = vst.msk [vmem:[#allocation2 + $0x4] sm:$0xf] %vm384, %v388
    %391 = vrot.lane.b32.xlu0 %v337, 64
    %v392 = vpop.permute.xlu0 %391
    %394 = vst.msk [vmem:[#allocation2 + $0x8] sm:$0xf] %vm384, %v392
    %395 = vrot.lane.b32.xlu0 %v337, 32
    %v396 = vpop.permute.xlu0 %395
    %398 = vst.msk [vmem:[#allocation2 + $0xc] sm:$0xf] %vm384, %v396
    %399 = vst.msk [vmem:[#allocation2 + $0x10] sm:$0xf] %vm384, %v339
    %401 = vrot.lane.b32.xlu0 %v339, 96
    %v402 = vpop.permute.xlu0 %401
    %404 = vst.msk [vmem:[#allocation2 + $0x14] sm:$0xf] %vm384, %v402
    %405 = vrot.lane.b32.xlu0 %v339, 64
    %v406 = vpop.permute.xlu0 %405
    %408 = vst.msk [vmem:[#allocation2 + $0x18] sm:$0xf] %vm384, %v406
    %409 = vrot.lane.b32.xlu0 %v339, 32
    %v410 = vpop.permute.xlu0 %409
    %412 = vst.msk [vmem:[#allocation2 + $0x1c] sm:$0xf] %vm384, %v410
    %413 = vst.msk [vmem:[#allocation2 + $0x20] sm:$0xf] %vm384, %v378
    %415 = vrot.lane.b32.xlu0 %v378, 96
    %v416 = vpop.permute.xlu0 %415
    %418 = vst.msk [vmem:[#allocation2 + $0x24] sm:$0xf] %vm384, %v416
    %419 = vrot.lane.b32.xlu0 %v378, 64
    %v420 = vpop.permute.xlu0 %419
    %422 = vst.msk [vmem:[#allocation2 + $0x28] sm:$0xf] %vm384, %v420
    %423 = vrot.lane.b32.xlu0 %v378, 32
    %v424 = vpop.permute.xlu0 %423
    %426 = vst.msk [vmem:[#allocation2 + $0x2c] sm:$0xf] %vm384, %v424
    %427 = vst.msk [vmem:[#allocation2 + $0x30] sm:$0xf] %vm384, %v380
    %429 = vrot.lane.b32.xlu0 %v380, 96
    %v430 = vpop.permute.xlu0 %429
    %432 = vst.msk [vmem:[#allocation2 + $0x34] sm:$0xf] %vm384, %v430
    %433 = vrot.lane.b32.xlu0 %v380, 64
    %v434 = vpop.permute.xlu0 %433
    %436 = vst.msk [vmem:[#allocation2 + $0x38] sm:$0xf] %vm384, %v434
    %437 = vrot.lane.b32.xlu0 %v380, 32
    %v438 = vpop.permute.xlu0 %437
    %440 = vst.msk [vmem:[#allocation2 + $0x3c] sm:$0xf] %vm384, %v438
    %v441 = vld [vmem:[%s4] sm:$0xf]
    %v442 = vld [vmem:[#allocation2] sm:$0xff]
    %v443 = vld [vmem:[#allocation2 + $0x8] sm:$0xff]
    %v444 = vld [vmem:[#allocation2 + $0x10] sm:$0xff]
    %v445 = vld [vmem:[#allocation2 + $0x18] sm:$0xff]
    %v446 = vld [vmem:[#allocation2 + $0x20] sm:$0xff]
    %v447 = vld [vmem:[#allocation2 + $0x28] sm:$0xff]
    %v448 = vld [vmem:[#allocation2 + $0x30] sm:$0xff]
    %v449 = vld [vmem:[#allocation2 + $0x38] sm:$0xff]
    %v450 = vpack.c.bf16 %v443, %v442
    %v451 = vpack.c.bf16 %v445, %v444
    %v452 = vpack.c.bf16 %v447, %v446
    %v453 = vpack.c.bf16 %v449, %v448
    %v454 = vld [vmem:[%s5] sm:$0xff]
    %456 = vset.pattern.permute.xlu0 0
    %457 = vperm.xlu0 %456, %v454
    %v458 = vpop.permute.xlu0 %457
    %vm460 = vcmask 523264
    %v462 = vsel %vm460, %v441, 0
    %464 = vmatprep.subr.bf16.mxu0 0
    %465 = vmatpush1.bf16.msra.mxu0 %v450
    %466 = vmatprep.subr.bf16.mxu0 0
    %467 = vmatpush1.bf16.msra.mxu0 %v451
    %468 = vmatprep.subr.bf16.mxu0 0
    %469 = vmatpush1.bf16.msra.mxu0 %v452
    %470 = vmatprep.subr.bf16.mxu0 0
    %471 = vmatpush1.bf16.msra.mxu0 %v453
    %472 = vmatprep.subr.bf16.mxu0 0
    %473 = vmatpush1.bf16.msra.mxu0 0
    %474 = vmatprep.subr.bf16.mxu0 0
    %475 = vmatpush1.bf16.msra.mxu0 0
    %476 = vmatprep.subr.bf16.mxu0 0
    %477 = vmatpush1.bf16.msra.mxu0 0
    %478 = vmatprep.subr.bf16.mxu0 0
    %479 = vmatpush1.bf16.msra.mxu0 0
    %480 = vmatprep.subr.bf16.mxu0 0
    %481 = vmatpush1.bf16.msra.mxu0 0
    %482 = vmatprep.subr.bf16.mxu0 0
    %483 = vmatpush1.bf16.msra.mxu0 0
    %484 = vmatprep.subr.bf16.mxu0 0
    %485 = vmatpush1.bf16.msra.mxu0 0
    %486 = vmatprep.subr.bf16.mxu0 0
    %487 = vmatpush1.bf16.msra.mxu0 0
    %488 = vmatprep.subr.bf16.mxu0 0
    %489 = vmatpush1.bf16.msra.mxu0 0
    %490 = vmatprep.subr.bf16.mxu0 0
    %491 = vmatpush1.bf16.msra.mxu0 0
    %492 = vmatprep.subr.bf16.mxu0 0
    %493 = vmatpush1.bf16.msra.mxu0 0
    %494 = vmatprep.subr.bf16.mxu0 0
    %495 = vmatpush1.bf16.msra.mxu0 0
    %496 = vmatprep.mubr.bf16.mxu0 0
    %497 = vmatmul.mubr.bf16.gmra.mrb[0].mxu0 %v462
    %v498 = vpop.f32.mrb[0].mxu0
    %v499 = vadd.f32 %v458, %v498
    %v500 = vpop.f32.mrb[0].mxu0
    %v501 = vpop.f32.mrb[0].mxu0
    %v502 = vpop.f32.mrb[0].mxu0
    %503 = vdwg.mxu0
    %vm504 = vcmp.gt.f32.partialorder %v499, 0.0
    %v505 = vmul.f32 %v499, 0.1
    %v506 = vsel %vm504, %v499, %v505
    %vm507 = vcmask 122880
    %508 = vst.msk [vmem:[#allocation3] sm:$0x1] %vm507, %v506
    %510 = vrot.lane.b32.xlu0 %v506, 16
    %v511 = vpop.permute.xlu0 %510
    %vm513 = vcmask 255105
    %514 = vst.msk [vmem:[#allocation3 - $0x1] sm:$0x2] %vm513, %v511
    %515 = vrot.lane.b32.xlu0 %v506, 32
    %v516 = vpop.permute.xlu0 %515
    %vm518 = vcmask 387330
    %519 = vst.msk [vmem:[#allocation3 - $0x2] sm:$0x4] %vm518, %v516
    %520 = vrot.lane.b32.xlu0 %v506, 48
    %v521 = vpop.permute.xlu0 %520
    %vm523 = vcmask 519555
    %524 = vst.msk [vmem:[#allocation3 - $0x3] sm:$0x8] %vm523, %v521
    %525 = vrot.lane.b32.xlu0 %v506, 64
    %v526 = vpop.permute.xlu0 %525
    %vm528 = vcmask 651780
    %529 = vst.msk [vmem:[#allocation3 - $0x4] sm:$0x10] %vm528, %v526
    %530 = vrot.lane.b32.xlu0 %v506, 80
    %v531 = vpop.permute.xlu0 %530
    %vm533 = vcmask 784005
    %534 = vst.msk [vmem:[#allocation3 - $0x5] sm:$0x20] %vm533, %v531
    %535 = vrot.lane.b32.xlu0 %v506, 96
    %v536 = vpop.permute.xlu0 %535
    %vm538 = vcmask 916230
    %539 = vst.msk [vmem:[#allocation3 - $0x6] sm:$0x40] %vm538, %v536
    %540 = vrot.lane.b32.xlu0 %v506, 112
    %v541 = vpop.permute.xlu0 %540
    %vm543 = vcmask 1048455
    %544 = vst.msk [vmem:[#allocation3 - $0x7] sm:$0x80] %vm543, %v541
    %545 = vst.msk [vmem:[#allocation3 + $0x1] sm:$0x1] %vm507, %v541
    %546 = vst.msk [vmem:[#allocation3] sm:$0x2] %vm513, %v506
    %547 = vst.msk [vmem:[#allocation3 - $0x1] sm:$0x4] %vm518, %v511
    %548 = vst.msk [vmem:[#allocation3 - $0x2] sm:$0x8] %vm523, %v516
    %549 = vst.msk [vmem:[#allocation3 - $0x3] sm:$0x10] %vm528, %v521
    %550 = vst.msk [vmem:[#allocation3 - $0x4] sm:$0x20] %vm533, %v526
    %551 = vst.msk [vmem:[#allocation3 - $0x5] sm:$0x40] %vm538, %v531
    %552 = vst.msk [vmem:[#allocation3 - $0x6] sm:$0x80] %vm543, %v536
    %v553 = vld [vmem:[#allocation3] sm:$0x3]
    %v554 = vpack.c.bf16 %v553, %v553
    %v555 = vld [vmem:[%s6] sm:$0xff]
    %v556 = vld [vmem:[%s6 + $0x8] sm:$0xff]
    %v557 = vld [vmem:[%s6 + $0x10] sm:$0xff]
    %v558 = vld [vmem:[%s6 + $0x18] sm:$0xff]
    %v559 = vld [vmem:[%s6 + $0x20] sm:$0xff]
    %v560 = vld [vmem:[%s6 + $0x28] sm:$0xff]
    %v561 = vld [vmem:[%s6 + $0x30] sm:$0xff]
    %v562 = vld [vmem:[%s6 + $0x38] sm:$0xff]
    %v563 = vld [vmem:[%s6 + $0x40] sm:$0xff]
    %v564 = vld [vmem:[%s6 + $0x48] sm:$0xff]
    %v565 = vld [vmem:[%s6 + $0x50] sm:$0xff]
    %v566 = vld [vmem:[%s6 + $0x58] sm:$0xff]
    %v567 = vld [vmem:[%s6 + $0x60] sm:$0xff]
    %v568 = vld [vmem:[%s6 + $0x68] sm:$0xff]
    %v569 = vld [vmem:[%s6 + $0x70] sm:$0xff]
    %v570 = vld [vmem:[%s6 + $0x78] sm:$0xff]
    %v571 = vld [vmem:[%s6 + $0x80] sm:$0xff]
    %v572 = vld [vmem:[%s6 + $0x88] sm:$0xff]
    %v573 = vld [vmem:[%s6 + $0x90] sm:$0xff]
    %v574 = vld [vmem:[%s6 + $0x98] sm:$0xff]
    %v575 = vld [vmem:[%s6 + $0xa0] sm:$0xff]
    %v576 = vld [vmem:[%s6 + $0xa8] sm:$0xff]
    %v577 = vld [vmem:[%s6 + $0xb0] sm:$0xff]
    %v578 = vld [vmem:[%s6 + $0xb8] sm:$0xff]
    %v579 = vld [vmem:[%s6 + $0xc0] sm:$0xff]
    %v580 = vld [vmem:[%s6 + $0xc8] sm:$0xff]
    %v581 = vld [vmem:[%s6 + $0xd0] sm:$0xff]
    %v582 = vld [vmem:[%s6 + $0xd8] sm:$0xff]
    %v583 = vld [vmem:[%s6 + $0xe0] sm:$0xff]
    %v584 = vld [vmem:[%s6 + $0xe8] sm:$0xff]
    %v585 = vld [vmem:[%s6 + $0xf0] sm:$0xff]
    %v586 = vld [vmem:[%s6 + $0xf8] sm:$0xff]
    %v587 = vld [vmem:[%s7] sm:$0xf]
    %v589 = vlaneseq
    %v590 = vshrl.u32 %v589, 7
    %v591 = vsub.s32 0, %v590
    %v592 = vrot.slane %v587, %v591
    %v593 = vlaneseq
    %v594 = vshrl.u32 %v593, 7
    %v595 = vsub.s32 1, %v594
    %v596 = vrot.slane %v587, %v595
    %v597 = vlaneseq
    %v598 = vshrl.u32 %v597, 7
    %v599 = vsub.s32 2, %v598
    %v600 = vrot.slane %v587, %v599
    %v601 = vlaneseq
    %v602 = vshrl.u32 %v601, 7
    %v603 = vsub.s32 3, %v602
    %v604 = vrot.slane %v587, %v603
    %v641 = vunpack.c.l.b16 %v555
    %v642 = vunpack.c.h.b16 %v555
    %v643 = vunpack.c.l.b16 %v556
    %v644 = vunpack.c.h.b16 %v556
    %v645 = vunpack.c.l.b16 %v557
    %v646 = vunpack.c.h.b16 %v557
    %v647 = vunpack.c.l.b16 %v558
    %v648 = vunpack.c.h.b16 %v558
    %v649 = vunpack.c.l.b16 %v559
    %v650 = vunpack.c.h.b16 %v559
    %v651 = vunpack.c.l.b16 %v560
    %v652 = vunpack.c.h.b16 %v560
    %v653 = vunpack.c.l.b16 %v561
    %v654 = vunpack.c.h.b16 %v561
    %v655 = vunpack.c.l.b16 %v562
    %v656 = vunpack.c.h.b16 %v562
    %v657 = vunpack.c.l.b16 %v563
    %v658 = vunpack.c.h.b16 %v563
    %v659 = vunpack.c.l.b16 %v564
    %v660 = vunpack.c.h.b16 %v564
    %v661 = vunpack.c.l.b16 %v565
    %v662 = vunpack.c.h.b16 %v565
    %v663 = vunpack.c.l.b16 %v566
    %v664 = vunpack.c.h.b16 %v566
    %v665 = vunpack.c.l.b16 %v567
    %v666 = vunpack.c.h.b16 %v567
    %v667 = vunpack.c.l.b16 %v568
    %v668 = vunpack.c.h.b16 %v568
    %v669 = vunpack.c.l.b16 %v569
    %v670 = vunpack.c.h.b16 %v569
    %v671 = vunpack.c.l.b16 %v570
    %v672 = vunpack.c.h.b16 %v570
    %v673 = vunpack.c.l.b16 %v571
    %v674 = vunpack.c.h.b16 %v571
    %v675 = vunpack.c.l.b16 %v572
    %v676 = vunpack.c.h.b16 %v572
    %v677 = vunpack.c.l.b16 %v573
    %v678 = vunpack.c.h.b16 %v573
    %v679 = vunpack.c.l.b16 %v574
    %v680 = vunpack.c.h.b16 %v574
    %v681 = vunpack.c.l.b16 %v575
    %v682 = vunpack.c.h.b16 %v575
    %v683 = vunpack.c.l.b16 %v576
    %v684 = vunpack.c.h.b16 %v576
    %v685 = vunpack.c.l.b16 %v577
    %v686 = vunpack.c.h.b16 %v577
    %v687 = vunpack.c.l.b16 %v578
    %v688 = vunpack.c.h.b16 %v578
    %v689 = vunpack.c.l.b16 %v579
    %v690 = vunpack.c.h.b16 %v579
    %v691 = vunpack.c.l.b16 %v580
    %v692 = vunpack.c.h.b16 %v580
    %v693 = vunpack.c.l.b16 %v581
    %v694 = vunpack.c.h.b16 %v581
    %v695 = vunpack.c.l.b16 %v582
    %v696 = vunpack.c.h.b16 %v582
    %v697 = vunpack.c.l.b16 %v583
    %v698 = vunpack.c.h.b16 %v583
    %v699 = vunpack.c.l.b16 %v584
    %v700 = vunpack.c.h.b16 %v584
    %v701 = vunpack.c.l.b16 %v585
    %v702 = vunpack.c.h.b16 %v585
    %v703 = vunpack.c.l.b16 %v586
    %v704 = vunpack.c.h.b16 %v586
    %v705 = vpack.c.b16 %v645, %v641
    %v706 = vpack.c.b16 %v646, %v642
    %v707 = vpack.c.b16 %v647, %v643
    %v708 = vpack.c.b16 %v648, %v644
    %v709 = vpack.c.b16 %v653, %v649
    %v710 = vpack.c.b16 %v654, %v650
    %v711 = vpack.c.b16 %v655, %v651
    %v712 = vpack.c.b16 %v656, %v652
    %v713 = vpack.c.b16 %v661, %v657
    %v714 = vpack.c.b16 %v662, %v658
    %v715 = vpack.c.b16 %v663, %v659
    %v716 = vpack.c.b16 %v664, %v660
    %v717 = vpack.c.b16 %v669, %v665
    %v718 = vpack.c.b16 %v670, %v666
    %v719 = vpack.c.b16 %v671, %v667
    %v720 = vpack.c.b16 %v672, %v668
    %v721 = vpack.c.b16 %v677, %v673
    %v722 = vpack.c.b16 %v678, %v674
    %v723 = vpack.c.b16 %v679, %v675
    %v724 = vpack.c.b16 %v680, %v676
    %v725 = vpack.c.b16 %v685, %v681
    %v726 = vpack.c.b16 %v686, %v682
    %v727 = vpack.c.b16 %v687, %v683
    %v728 = vpack.c.b16 %v688, %v684
    %v729 = vpack.c.b16 %v693, %v689
    %v730 = vpack.c.b16 %v694, %v690
    %v731 = vpack.c.b16 %v695, %v691
    %v732 = vpack.c.b16 %v696, %v692
    %v733 = vpack.c.b16 %v701, %v697
    %v734 = vpack.c.b16 %v702, %v698
    %v735 = vpack.c.b16 %v703, %v699
    %v736 = vpack.c.b16 %v704, %v700
    %769 = vmatprep.subr.bf16.mxu0 %v706
    %770 = vmatpush1.bf16.msra.mxu0 %v705
    %771 = vmatprep.subr.bf16.mxu0 %v710
    %772 = vmatpush1.bf16.msra.mxu0 %v709
    %773 = vmatprep.subr.bf16.mxu0 %v714
    %774 = vmatpush1.bf16.msra.mxu0 %v713
    %775 = vmatprep.subr.bf16.mxu0 %v718
    %776 = vmatpush1.bf16.msra.mxu0 %v717
    %777 = vmatprep.subr.bf16.mxu0 %v722
    %778 = vmatpush1.bf16.msra.mxu0 %v721
    %779 = vmatprep.subr.bf16.mxu0 %v726
    %780 = vmatpush1.bf16.msra.mxu0 %v725
    %781 = vmatprep.subr.bf16.mxu0 %v730
    %782 = vmatpush1.bf16.msra.mxu0 %v729
    %783 = vmatprep.subr.bf16.mxu0 %v734
    %784 = vmatpush1.bf16.msra.mxu0 %v733
    %785 = vmatprep.subr.bf16.mxu0 0
    %786 = vmatpush1.bf16.msra.mxu0 0
    %787 = vmatprep.subr.bf16.mxu0 0
    %788 = vmatpush1.bf16.msra.mxu0 0
    %789 = vmatprep.subr.bf16.mxu0 0
    %790 = vmatpush1.bf16.msra.mxu0 0
    %791 = vmatprep.subr.bf16.mxu0 0
    %792 = vmatpush1.bf16.msra.mxu0 0
    %793 = vmatprep.subr.bf16.mxu0 0
    %794 = vmatpush1.bf16.msra.mxu0 0
    %795 = vmatprep.subr.bf16.mxu0 0
    %796 = vmatpush1.bf16.msra.mxu0 0
    %797 = vmatprep.subr.bf16.mxu0 0
    %798 = vmatpush1.bf16.msra.mxu0 0
    %799 = vmatprep.subr.bf16.mxu0 0
    %800 = vmatpush1.bf16.msra.mxu0 0
    %801 = vmatprep.mubr.bf16.mxu0 0
    %802 = vmatmul.mubr.bf16.gmra.mrb[0].mxu0 %v554
    %v803 = vpop.f32.mrb[0].mxu0
    %v804 = vadd.f32 %v592, %v803
    %v805 = vpop.f32.mrb[0].mxu0
    %v806 = vadd.f32 %v596, %v805
    %v807 = vpop.f32.mrb[0].mxu0
    %v808 = vpop.f32.mrb[0].mxu0
    %809 = vdwg.mxu0
    %810 = vmatprep.subr.bf16.mxu0 %v708
    %811 = vmatpush1.bf16.msra.mxu0 %v707
    %812 = vmatprep.subr.bf16.mxu0 %v712
    %813 = vmatpush1.bf16.msra.mxu0 %v711
    %814 = vmatprep.subr.bf16.mxu0 %v716
    %815 = vmatpush1.bf16.msra.mxu0 %v715
    %816 = vmatprep.subr.bf16.mxu0 %v720
    %817 = vmatpush1.bf16.msra.mxu0 %v719
    %818 = vmatprep.subr.bf16.mxu0 %v724
    %819 = vmatpush1.bf16.msra.mxu0 %v723
    %820 = vmatprep.subr.bf16.mxu0 %v728
    %821 = vmatpush1.bf16.msra.mxu0 %v727
    %822 = vmatprep.subr.bf16.mxu0 %v732
    %823 = vmatpush1.bf16.msra.mxu0 %v731
    %824 = vmatprep.subr.bf16.mxu0 %v736
    %825 = vmatpush1.bf16.msra.mxu0 %v735
    %826 = vmatprep.subr.bf16.mxu0 0
    %827 = vmatpush1.bf16.msra.mxu0 0
    %828 = vmatprep.subr.bf16.mxu0 0
    %829 = vmatpush1.bf16.msra.mxu0 0
    %830 = vmatprep.subr.bf16.mxu0 0
    %831 = vmatpush1.bf16.msra.mxu0 0
    %832 = vmatprep.subr.bf16.mxu0 0
    %833 = vmatpush1.bf16.msra.mxu0 0
    %834 = vmatprep.subr.bf16.mxu0 0
    %835 = vmatpush1.bf16.msra.mxu0 0
    %836 = vmatprep.subr.bf16.mxu0 0
    %837 = vmatpush1.bf16.msra.mxu0 0
    %838 = vmatprep.subr.bf16.mxu0 0
    %839 = vmatpush1.bf16.msra.mxu0 0
    %840 = vmatprep.subr.bf16.mxu0 0
    %841 = vmatpush1.bf16.msra.mxu0 0
    %842 = vmatprep.mubr.bf16.mxu0 0
    %843 = vmatmul.mubr.bf16.gmra.mrb[0].mxu0 %v554
    %v844 = vpop.f32.mrb[0].mxu0
    %v845 = vadd.f32 %v600, %v844
    %v846 = vpop.f32.mrb[0].mxu0
    %v847 = vadd.f32 %v604, %v846
    %v848 = vpop.f32.mrb[0].mxu0
    %v849 = vpop.f32.mrb[0].mxu0
    %850 = vdwg.mxu0
    %v855 = vcombine.low %v804, %v806
    %v856 = vcombine.low %v845, %v847
    %v858 = vunpack.c.l.s4 1983009808
    %v859 = vunpack.c.0.s8 %v858
    %v860 = vlaneseq
    %v861 = vshrl.u32 %v860, 7
    %v862 = vsub.s32 %v859, %v861
    %v863 = vrot.slane %v855, %v862
    %v865 = vunpack.c.l.s4 1983009808
    %v866 = vunpack.c.0.s8 %v865
    %v867 = vlaneseq
    %v868 = vshrl.u32 %v867, 7
    %v869 = vsub.s32 %v866, %v868
    %v870 = vrot.slane %v856, %v869
    %v871 = vcombine.low %v863, %v870
    %873 = vst [vmem:[#allocation4] sm:$0xff] %v871
    // Predicated region
    $region34: #{encoder_forward.1} parent=1 // pred_check
      _
    $region35: #{encoder_forward.1} parent=1 // pred_check_branch
      %875 = sbr.rel (0) target = $region37
    $region36: #{encoder_forward.1} parent=1 // pred_region
      %s877 = ssub.s32 128, 128
      %878 = vsyncadd [#allocation5], %s877
      %s880 = sshll.u32 [#allocation4], 4
      %s881 = int_to_ptr.vmem [resolvable:$true] %s880
      %883 = dma.vmem_to_hbm [thread:$0]  %s881, 128, %s8, [#allocation5]
    $region37: #{encoder_forward.1} parent=1 // pred_fallthru
      _
    // Predicated region
    $region38: #{encoder_forward.1} parent=1 // pred_check
      _
    $region39: #{encoder_forward.1} parent=1 // pred_check_branch
      %885 = sbr.rel (0) target = $region41
    $region40: #{encoder_forward.1} parent=1 // pred_region
      %886 = dma.done [#allocation5], 128
    $region41: #{encoder_forward.1} parent=1 // pred_fallthru
      _
    %887 = vsyncpa [#allocation5], 1

</llo_original>
